<compile_context>
chip_gen: v5e
topology: v5e:2x2
jax: 0.10.0
libtpu: 0.0.40
codegen_flags: <defaults>
</compile_context>

<pallas_src>
import functools
import math

import jax
import jax.numpy as jnp
from jax.experimental import pallas as pl
from jax.experimental.pallas import tpu as pltpu


# ----------------------------------------------------------------------------
# Kernels
# ----------------------------------------------------------------------------
def _fast_kernel(values_ref, out_ref, *, L, H):
    """out = sum_L values + 1.0  (softmax over L always sums to 1).

    values_ref is the lane-dense (BT, L*H) block; summing over L is done with
    static lane slices (no in-kernel reshape needed).  Optional narrow stream
    dtype is upcast here (cheap VPU work, huge slack in this HBM-bound op)."""
    acc = values_ref[:, 0:H].astype(jnp.float32)
    for l in range(1, L):
        acc = acc + values_ref[:, l * H:(l + 1) * H].astype(jnp.float32)
    out_ref[...] = acc + 1.0


def _faithful_kernel(*refs, has_mask):
    """Full keys/tanh/softmax pipeline (numerically mirrors the module)."""
    if has_mask:
        values_ref, mask_ref, w_ref, b_ref, q_ref, out_ref = refs
    else:
        values_ref, w_ref, b_ref, q_ref, out_ref = refs

    bt, L, H = values_ref.shape
    v = values_ref[...]                                            # (BT, L, H) f32

    # keys = tanh(values @ W^T + b): one tall-M MXU matmul over merged rows.
    keys = jnp.tanh(
        jnp.dot(v.reshape(bt * L, H), w_ref[...],
                preferred_element_type=jnp.float32) + b_ref[...])  # (BT*L, A)

    # logits as a lane-dense (BT, L) tensor (not a (., 1) column); the
    # 1/sqrt(A * var(query)) scale is pre-folded into q host-side.
    q = q_ref[...].reshape(1, 1, -1)                               # (1, 1, A)
    logits = jnp.sum(keys.reshape(bt, L, -1) * q, axis=-1)         # (BT, L)

    if has_mask:
        scores = logits * mask_ref[...]                            # (BT, L)
    else:
        scores = jnp.zeros_like(logits)                            # mask=None -> zero scores

    # Softmax over the sequence axis (last axis of the (BT, L) layout).
    smax = jnp.max(scores, axis=-1, keepdims=True)
    e = jnp.exp(scores - smax)
    probs = e / jnp.sum(e, axis=-1, keepdims=True)                 # (BT, L)

    # context = sum_L values + (sum_L probs) broadcast over H.
    out_ref[...] = jnp.sum(v, axis=1) + jnp.sum(probs, axis=-1, keepdims=True)


# ----------------------------------------------------------------------------
# Tiling helpers
# ----------------------------------------------------------------------------
def _round_up(x, m):
    return ((x + m - 1) // m) * m


def _vmem_capacity_bytes():
    try:
        return int(pltpu.get_tpu_info().vmem_capacity_bytes)
    except Exception:
        return 64 * 1024 * 1024        # conservative: v7x per-TensorCore VMEM


def _pick_batch_tile(B_pad, row_bytes, *, min_grid_steps=4):
    """Largest multiple-of-8 batch tile that (a) divides the padded batch,
    (b) keeps >= min_grid_steps grid steps when possible (2 per TensorCore on
    v7x megacore + prefetch/writeback overlap), and (c) keeps the
    double-buffered, lane-padded working set within this generation's VMEM."""
    # ~24 MiB usable on v7x (64 MiB/TC), capped at 28 MiB on v5e/v6e (128 MiB).
    budget = min(max(_vmem_capacity_bytes() // 2 - (8 << 20), 8 << 20), 28 << 20)
    cap = min(B_pad,
              max(8, budget // max(row_bytes, 1)),
              max(8, B_pad // min_grid_steps))
    cap -= cap % 8
    cap = max(cap, 8)
    for bt in range(cap, 7, -8):
        if B_pad % bt == 0:
            return bt
    return 8                           # B_pad is a multiple of 8, always legal


# ----------------------------------------------------------------------------
# Wrapper
# ----------------------------------------------------------------------------
def self_attention_forward(values, w_t, bias, query, mask=None, *,
                           faithful=False, stream_dtype=None, batch_tile=None):
    """values: (B, L, H); w_t: (H, A) (= Linear.weight.T); bias: (A,);
    query: (A, 1); mask: (B, L) of 0/1 or None.  Returns (B, H) float32.

    faithful=False (default): exploits the exact identity out = sum_L values + 1
      (softmax over L sums to 1 for any mask) -> pure HBM-streaming reduction.
    faithful=True: runs the full keys/tanh/softmax pipeline in-kernel.
    stream_dtype: optional narrow dtype (e.g. jnp.bfloat16) for streaming
      `values` on the fast path (halves HBM-read bytes; v5e is read-bound)."""
    B, L, H = values.shape
    A = w_t.shape[1]

    # Pad batch to a multiple of 8: satisfies the (8, 128) sublane rule for
    # batch tiles and keeps pipelining / both v7x TensorCores busy.
    B_pad = _round_up(B, 8)

    vmem_cap = _vmem_capacity_bytes()
    compiler_params = pltpu.CompilerParams(
        dimension_semantics=("parallel",),                   # megacore-shard batch
        vmem_limit_bytes=int(min(vmem_cap // 2, 64 * 1024 * 1024)),
    )

    if not faithful:
        dt = jnp.dtype(stream_dtype) if stream_dtype is not None else jnp.dtype(jnp.float32)
        v2d = values.reshape(B, L * H).astype(dt)            # lane-dense presentation
        if B_pad != B:
            v2d = jnp.pad(v2d, ((0, B_pad - B), (0, 0)))

        # Per-batch-row VMEM bytes (lane-padded, double-buffered in/out blocks).
        row_bytes = (2 * _round_up(L * H, 128) * dt.itemsize
                     + 2 * _round_up(H, 128) * 4)
        BT = batch_tile if batch_tile is not None else _pick_batch_tile(B_pad, row_bytes)
        assert B_pad % BT == 0 and BT % 8 == 0

        out = pl.pallas_call(
            functools.partial(_fast_kernel, L=L, H=H),
            out_shape=jax.ShapeDtypeStruct((B_pad, H), jnp.float32),
            grid_spec=pltpu.PrefetchScalarGridSpec(
                num_scalar_prefetch=0,
                grid=(B_pad // BT,),
                in_specs=[pl.BlockSpec((BT, L * H), lambda i: (i, 0))],
                out_specs=pl.BlockSpec((BT, H), lambda i: (i, 0)),
            ),
            compiler_params=compiler_params,
        )(v2d)
        return out[:B]

    # ------------------------- faithful path --------------------------------
    v3d = values.astype(jnp.float32)
    if B_pad != B:
        v3d = jnp.pad(v3d, ((0, B_pad - B), (0, 0), (0, 0)))

    # VMEM model: values block is lane-padded H -> 128; add keys intermediate.
    row_bytes = (2 * L * _round_up(H, 128) * 4               # values, double-buffered
                 + 2 * _round_up(H, 128) * 4                 # output, double-buffered
                 + L * _round_up(A, 128) * 4)                 # keys intermediate
    BT = batch_tile if batch_tile is not None else _pick_batch_tile(B_pad, row_bytes)
    assert B_pad % BT == 0 and BT % 8 == 0

    # Fold 1/sqrt(A * var(query)) (torch.var: unbiased) into the query row.
    qvar = jnp.var(query, ddof=1)
    q_scaled = (query.reshape(1, A) / jnp.sqrt(A * qvar)).astype(jnp.float32)
    b2 = bias.reshape(1, A).astype(jnp.float32)
    w32 = w_t.astype(jnp.float32)

    vals_spec = pl.BlockSpec((BT, L, H), lambda i: (i, 0, 0))
    shared = lambda shape: pl.BlockSpec(shape, lambda i: (0, 0))
    has_mask = mask is not None
    if has_mask:
        # Tiny lane-dense (B, L) multiplier instead of a (B, L, H)/(B, L, 1) slab.
        mask_mul = (1.0 - mask.astype(jnp.float32)) * -1000.0
        if B_pad != B:
            mask_mul = jnp.pad(mask_mul, ((0, B_pad - B), (0, 0)))
        in_specs = [vals_spec, pl.BlockSpec((BT, L), lambda i: (i, 0)),
                    shared((H, A)), shared((1, A)), shared((1, A))]
        args = (v3d, mask_mul, w32, b2, q_scaled)
    else:
        in_specs = [vals_spec, shared((H, A)), shared((1, A)), shared((1, A))]
        args = (v3d, w32, b2, q_scaled)

    out = pl.pallas_call(
        functools.partial(_faithful_kernel, has_mask=has_mask),
        out_shape=jax.ShapeDtypeStruct((B_pad, H), jnp.float32),
        grid_spec=pltpu.PrefetchScalarGridSpec(
            num_scalar_prefetch=0,
            grid=(B_pad // BT,),
            in_specs=in_specs,
            out_specs=pl.BlockSpec((BT, H), lambda i: (i, 0)),
        ),
        compiler_params=compiler_params,
    )(*args)
    return out[:B]


# ----------------------------------------------------------------------------
# Pure-JAX reference (mirrors the PyTorch forward)
# ----------------------------------------------------------------------------
def _ref_forward(values, w_t, bias, query, mask=None):
    A = w_t.shape[1]
    if mask is None:
        m = jnp.zeros_like(values)                                 # (B, L, H)
    else:
        m = (1.0 - mask.astype(jnp.float32))[..., None] * -1000.0  # (B, L, 1)
    keys = jnp.tanh(values @ w_t + bias)
    logits = (keys @ query) / jnp.sqrt(A * jnp.var(query, ddof=1))
    probs = jax.nn.softmax(logits * m, axis=1)
    return jnp.sum(probs + values, axis=1)


if __name__ == "__main__":
    B, L, H, A = 16, 8, 32, 16          # batch, seq, input_size(hidden), attention_size

    key = jax.random.PRNGKey(0)
    k1, k2, k3, k4, k5 = jax.random.split(key, 5)

    values = jax.random.normal(k1, (B, L, H), dtype=jnp.float32)
    bound = 1.0 / math.sqrt(H)          # nn.Linear default-style init, deterministic
    w_t = jax.random.uniform(k2, (H, A), minval=-bound, maxval=bound, dtype=jnp.float32)
    bias = jax.random.uniform(k3, (A,), minval=-bound, maxval=bound, dtype=jnp.float32)
    query = 0.02 * jax.random.normal(k4, (A, 1), dtype=jnp.float32)   # normal_(0, 0.02)
    mask = (jax.random.uniform(k5, (B, L)) > 0.3).astype(jnp.float32)

    exp_none = _ref_forward(values, w_t, bias, query, None)
    exp_mask = _ref_forward(values, w_t, bias, query, mask)

    # Fast (identity) path: mask=None and explicit mask (mask is irrelevant).
    out_fast_none = jax.block_until_ready(
        self_attention_forward(values, w_t, bias, query, None))
    out_fast_mask = jax.block_until_ready(
        self_attention_forward(values, w_t, bias, query, mask))

    # Faithful path: full keys/tanh/softmax pipeline, both mask variants.
    out_faith_none = jax.block_until_ready(
        self_attention_forward(values, w_t, bias, query, None, faithful=True))
    out_faith_mask = jax.block_until_ready(
        self_attention_forward(values, w_t, bias, query, mask, faithful=True))

    for got, exp in [(out_fast_none, exp_none), (out_fast_mask, exp_mask),
                     (out_faith_none, exp_none), (out_faith_mask, exp_mask)]:
        assert got.shape == (B, H)
        assert jnp.allclose(got, exp, atol=1e-5, rtol=1e-5), \
            float(jnp.max(jnp.abs(got - exp)))

    # bf16-streamed fast path (v5e HBM-read-bound option); looser tolerance.
    out_bf16 = jax.block_until_ready(
        self_attention_forward(values, w_t, bias, query, None,
                               stream_dtype=jnp.bfloat16))
    assert jnp.allclose(out_bf16, exp_none, atol=1e-1, rtol=0.0), \
        float(jnp.max(jnp.abs(out_bf16 - exp_none)))

    print("KERNEL_OK")
</pallas_src>

<mosaic_0001>
module attributes {stable_mosaic.version = 11 : i64} {
  func.func @_fast_kernel(%arg0: i32, %arg1: memref<8x256xf32, #tpu.memory_space<vmem>>, %arg2: memref<8x32xf32, #tpu.memory_space<vmem>>) attributes {dimension_semantics = [#tpu.dimension_semantics<parallel>], iteration_bounds = array<i64: 2>, scalar_prefetch = 0 : i64, scratch_operands = 0 : i64, tpu.core_type = #tpu.core_type<tc>, window_params = [{transform_indices = @transform_0, window_bounds = array<i64: 8, 256>}, {transform_indices = @transform_1, window_bounds = array<i64: 8, 32>}]} {
    %c0 = arith.constant 0 : index
    %c0_0 = arith.constant 0 : index
    %0 = vector.load %arg1[%c0, %c0_0] : memref<8x256xf32, #tpu.memory_space<vmem>>, vector<8x32xf32>
    %c0_1 = arith.constant 0 : index
    %c32 = arith.constant 32 : index
    %1 = vector.load %arg1[%c0_1, %c32] : memref<8x256xf32, #tpu.memory_space<vmem>>, vector<8x32xf32>
    %2 = arith.addf %0, %1 : vector<8x32xf32>
    %c0_2 = arith.constant 0 : index
    %c64 = arith.constant 64 : index
    %3 = vector.load %arg1[%c0_2, %c64] : memref<8x256xf32, #tpu.memory_space<vmem>>, vector<8x32xf32>
    %4 = arith.addf %2, %3 : vector<8x32xf32>
    %c0_3 = arith.constant 0 : index
    %c96 = arith.constant 96 : index
    %5 = vector.load %arg1[%c0_3, %c96] : memref<8x256xf32, #tpu.memory_space<vmem>>, vector<8x32xf32>
    %6 = arith.addf %4, %5 : vector<8x32xf32>
    %c0_4 = arith.constant 0 : index
    %c128 = arith.constant 128 : index
    %7 = vector.load %arg1[%c0_4, %c128] : memref<8x256xf32, #tpu.memory_space<vmem>>, vector<8x32xf32>
    %8 = arith.addf %6, %7 : vector<8x32xf32>
    %c0_5 = arith.constant 0 : index
    %c160 = arith.constant 160 : index
    %9 = vector.load %arg1[%c0_5, %c160] : memref<8x256xf32, #tpu.memory_space<vmem>>, vector<8x32xf32>
    %10 = arith.addf %8, %9 : vector<8x32xf32>
    %c0_6 = arith.constant 0 : index
    %c192 = arith.constant 192 : index
    %11 = vector.load %arg1[%c0_6, %c192] : memref<8x256xf32, #tpu.memory_space<vmem>>, vector<8x32xf32>
    %12 = arith.addf %10, %11 : vector<8x32xf32>
    %c0_7 = arith.constant 0 : index
    %c224 = arith.constant 224 : index
    %13 = vector.load %arg1[%c0_7, %c224] : memref<8x256xf32, #tpu.memory_space<vmem>>, vector<8x32xf32>
    %14 = arith.addf %12, %13 : vector<8x32xf32>
    %cst = arith.constant 1.000000e+00 : f32
    %15 = vector.broadcast %cst : f32 to vector<8x32xf32>
    %16 = arith.addf %14, %15 : vector<8x32xf32>
    %c0_8 = arith.constant 0 : index
    %c0_9 = arith.constant 0 : index
    %17 = vector.load %arg2[%c0_8, %c0_9] : memref<8x32xf32, #tpu.memory_space<vmem>>, vector<8x32xf32>
    tpu.vector_store %arg2[%c0_8, %c0_9], %16 {strides = array<i32>} : memref<8x32xf32, #tpu.memory_space<vmem>>, vector<8x32xf32>,
    return
  }
  func.func @transform_0(%arg0: i32) -> (i32, i32) {
    %c0_i32 = arith.constant 0 : i32
    %c0_i32_0 = arith.constant 0 : i32
    return %arg0, %c0_i32 : i32, i32
  }
  func.func @transform_1(%arg0: i32) -> (i32, i32) {
    %c0_i32 = arith.constant 0 : i32
    %c0_i32_0 = arith.constant 0 : i32
    return %arg0, %c0_i32 : i32, i32
  }
}

</mosaic_0001>

<llo_original>
// kernel: tpu_custom_call.1
$region0: #{tpu_custom_call.1}
  #allocation0 [shape = 'u32[]', space=smem, size = 0x4, offset = 0x4, fixed_abs, tag = 'smem constant byte address 0x4 - core index']
  #allocation1 [shape = 'u32[72,128]{1,0:T(1,128)}', space=vmem, size = 0x9000, scoped, tag = 'internal scratch']
  %s0 = inlined_call_operand.hbm [shape: f32[16,256], index: 0, kind: input, shape index: {}]
  %s1 = inlined_call_operand.hbm [shape: f32[16,32], index: 1, kind: output, shape index: {}]
  %s2 = sld [smem:[#allocation0]]
  $region41: #{tpu_custom_call.1} parent=0
    _
  %s4 = ssub.s32 1, %s2
  %s5 = scalar_select 0, %s4, %s2
  $region1: #{tpu_custom_call.1} parent=0
    #allocation2 [shape = 'u8[16384]{0}', space=vmem, size = 0x4000, scoped, tag = 'input window, operand 0']
    #allocation3 [shape = 's32[2]{0}', space=sflag, size = 0x8, scoped, tag = 'scoped memory for tpu_custom_call.1']
    #allocation4 [shape = 's32[2]{0}', space=sflag, size = 0x8, scoped, tag = 'scoped memory for tpu_custom_call.1']
    #allocation5 [shape = 'u8[8192]{0}', space=vmem, size = 0x2000, scoped, tag = 'output window, operand 0']
    %6 = vsyncpa [#allocation3], 0
    %s7 = scalar_lea.sflag [#allocation3], 1
    %8 = vsyncpa %s7, 0
    %9 = vsyncpa [#allocation4], 0
    %s10 = scalar_lea.sflag [#allocation4], 1
    %11 = vsyncpa %s10, 0
    loop: start=0, step=1, limit=4
    $region2: #{tpu_custom_call.1} parent=1 // loop_pre_header
      _
    $region3: #{tpu_custom_call.1} parent=1 // loop_header
      %s13 = sphi 0, %s17
      %p14 = scmp.ge.s32.totalorder %s13, 4
      %s23 = sphi 0, %s25
      %s26 = sphi 0, %s23
      %s27 = sphi 0, %s26
      %s43 = sphi 0, %s27
      %s49 = sphi 0, %s51
      %s52 = sphi 0, %s49
      %s53 = sphi 0, %s52
      %s69 = sphi 0, %s53
    $region4: #{tpu_custom_call.1} parent=1 // loop_header_branch
      %16 = sbr.rel (%p14) target = $region8
    $region5: #{tpu_custom_call.1} parent=1 // loop_body
      %s18 = ssub.s32 %s13, 1
      %s19 = ssub.s32 %s13, 2
      %s20 = sadd.s32 %s13, 1
      %s21 = ssub.s32 %s13, %s20
      %p22 = scmp.eq.s32.totalorder %s21, 0
      %s24 = sadd.s32 %s23, 1
      %s25 = scalar_select %p22, %s23, %s24
      %p28 = pneg %p22
      %p29 = scmp.eq.s32.totalorder %s13, 1
      %p30 = por %p28, %p29
      %p31 = scmp.ne.s32.totalorder %s23, %s26
      %p32 = scmp.eq.s32.totalorder %s13, 0
      %p33 = por %p31, %p32
      %p34 = scmp.ne.s32.totalorder %s23, %s26
      %p35 = scmp.eq.s32.totalorder %s18, 1
      %p36 = por %p34, %p35
      %p37 = scmp.ne.s32.totalorder %s26, %s27
      %p38 = scmp.eq.s32.totalorder %s18, 0
      %p39 = por %p37, %p38
      %p40 = scmp.ne.s32.totalorder %s26, %s27
      %p41 = scmp.eq.s32.totalorder %s19, 1
      %p42 = por %p40, %p41
      %p44 = scmp.ne.s32.totalorder %s27, %s43
      %p45 = scmp.eq.s32.totalorder %s19, 0
      %p46 = por %p44, %p45
      %s47 = ssub.s32 %s13, %s20
      %p48 = scmp.eq.s32.totalorder %s47, 0
      %s50 = sadd.s32 %s49, 1
      %s51 = scalar_select %p48, %s49, %s50
      %p54 = pneg %p48
      %p55 = scmp.eq.s32.totalorder %s13, 1
      %p56 = por %p54, %p55
      %p57 = scmp.ne.s32.totalorder %s49, %s52
      %p58 = scmp.eq.s32.totalorder %s13, 0
      %p59 = por %p57, %p58
      %p60 = scmp.ne.s32.totalorder %s49, %s52
      %p61 = scmp.eq.s32.totalorder %s18, 1
      %p62 = por %p60, %p61
      %p63 = scmp.ne.s32.totalorder %s52, %s53
      %p64 = scmp.eq.s32.totalorder %s18, 0
      %p65 = por %p63, %p64
      %p66 = scmp.ne.s32.totalorder %s52, %s53
      %p67 = scmp.eq.s32.totalorder %s19, 1
      %p68 = por %p66, %p67
      %p70 = scmp.ne.s32.totalorder %s53, %s69
      %p71 = scmp.eq.s32.totalorder %s19, 0
      %p72 = por %p70, %p71
      %p73 = scmp.le.s32.totalorder 1, %s13
      %p74 = scmp.lt.s32.totalorder %s13, 3
      %p75 = pnand %p73, %p74
      %p76 = pneg %p75
      // Predicated region
      $region9: #{tpu_custom_call.1} parent=5 // pred_check
        _
      $region10: #{tpu_custom_call.1} parent=5 // pred_check_branch
        %78 = sbr.rel (%p75) target = $region12
      $region11: #{tpu_custom_call.1} parent=5 // pred_region
        %s79 = ssub.s32 %s13, 1
      $region12: #{tpu_custom_call.1} parent=5 // pred_fallthru
        _
      %p80 = scmp.lt.s32.totalorder %s13, 2
      // Predicated region
      $region13: #{tpu_custom_call.1} parent=5 // pred_check
        %p81 = pneg %p80
      $region14: #{tpu_custom_call.1} parent=5 // pred_check_branch
        %83 = sbr.rel (%p81) target = $region16
      $region15: #{tpu_custom_call.1} parent=5 // pred_region
        // Predicated region
        $region17: #{tpu_custom_call.1} parent=15 // pred_check
          %p84 = pneg %p33
        $region18: #{tpu_custom_call.1} parent=15 // pred_check_branch
          %86 = sbr.rel (%p84) target = $region20
        $region19: #{tpu_custom_call.1} parent=15 // pred_region
          %s87 = sand.u32 %s23, 1
          %s88 = scalar_lea.sflag [#allocation3], %s87
          %s89 = sand.u32 %s23, 1
          %s90 = smul.addr %s89, 16
          %s91 = scalar_lea.vmem [#allocation2], %s90
          %93 = vsyncadd %s88, 0
          %s94 = smul.addr %s13, 2
          %s95 = smul.addr %s94, 8
          %s96 = scalar_lea.hbm %s0, %s95
          %s98 = sshll.u32 %s96, 4
          %s99 = int_to_ptr.hbm [resolvable:$true] %s98
          %s100 = sshll.u32 %s91, 4
          %s101 = int_to_ptr.vmem [resolvable:$true] %s100
          %103 = dma.hbm_to_vmem [thread:$0]  %s99, 256, %s101, %s88
        $region20: #{tpu_custom_call.1} parent=15 // pred_fallthru
          _
      $region16: #{tpu_custom_call.1} parent=5 // pred_fallthru
        _
      %p104 = scmp.le.s32.totalorder 1, %s13
      %p105 = scmp.lt.s32.totalorder %s13, 3
      %p106 = pnand %p104, %p105
      %p107 = pneg %p106
      // Predicated region
      $region21: #{tpu_custom_call.1} parent=5 // pred_check
        _
      $region22: #{tpu_custom_call.1} parent=5 // pred_check_branch
        %109 = sbr.rel (%p106) target = $region24
      $region23: #{tpu_custom_call.1} parent=5 // pred_region
        %s110 = ssub.s32 %s13, 1
        %s111 = sand.u32 %s26, 1
        %s112 = scalar_lea.sflag [#allocation3], %s111
        %s113 = sand.u32 %s26, 1
        %s114 = smul.addr %s113, 16
        %s115 = scalar_lea.vmem [#allocation2], %s114
        // Predicated region
        $region25: #{tpu_custom_call.1} parent=23 // pred_check
          %p116 = pneg %p39
        $region26: #{tpu_custom_call.1} parent=23 // pred_check_branch
          %118 = sbr.rel (%p116) target = $region28
        $region27: #{tpu_custom_call.1} parent=23 // pred_region
          %120 = dma.done %s112, 256
        $region28: #{tpu_custom_call.1} parent=23 // pred_fallthru
          _
        %s121 = sand.u32 %s26, 1
        %s122 = scalar_lea.sflag [#allocation3], %s121
        %s123 = sand.u32 %s26, 1
        %s124 = smul.addr %s123, 16
        %s125 = scalar_lea.vmem [#allocation2], %s124
        %p126 = pneg %p39
        %p127 = pneg %p36
        %p128 = pneg %p65
        %p129 = pneg %p62
        %s130 = sand.u32 %s52, 1
        %s131 = scalar_lea.sflag [#allocation4], %s130
        %s132 = sand.u32 %s52, 1
        %s133 = smul.addr %s132, 8
        %s134 = scalar_lea.vmem [#allocation5], %s133
        %v135 = vld [vmem:[%s115] sm:$0xff]
        %137 = vrot.lane.b32.xlu0 %v135, 96
        %v138 = vpop.permute.xlu0 %137
        %v140 = vadd.f32 %v135, %v138
        %141 = vrot.lane.b32.xlu0 %v135, 64
        %v142 = vpop.permute.xlu0 %141
        %v144 = vadd.f32 %v140, %v142
        %145 = vrot.lane.b32.xlu0 %v135, 32
        %v146 = vpop.permute.xlu0 %145
        %v148 = vadd.f32 %v144, %v146
        %v149 = vld [vmem:[%s115 + $0x8] sm:$0xff]
        %v150 = vadd.f32 %v148, %v149
        %152 = vrot.lane.b32.xlu0 %v149, 96
        %v153 = vpop.permute.xlu0 %152
        %v155 = vadd.f32 %v150, %v153
        %156 = vrot.lane.b32.xlu0 %v149, 64
        %v157 = vpop.permute.xlu0 %156
        %v159 = vadd.f32 %v155, %v157
        %160 = vrot.lane.b32.xlu0 %v149, 32
        %v161 = vpop.permute.xlu0 %160
        %v163 = vadd.f32 %v159, %v161
        %v164 = vadd.f32 %v163, 1.0
        %vm165 = vcmask 261120
        %166 = vst.msk [vmem:[%s134] sm:$0xff] %vm165, %v164
        %s167 = sand.u32 %s52, 1
        %s168 = scalar_lea.sflag [#allocation4], %s167
        %s169 = sand.u32 %s52, 1
        %s170 = smul.addr %s169, 8
        %s171 = scalar_lea.vmem [#allocation5], %s170
        // Predicated region
        $region29: #{tpu_custom_call.1} parent=23 // pred_check
          %p172 = pneg %p62
        $region30: #{tpu_custom_call.1} parent=23 // pred_check_branch
          %174 = sbr.rel (%p172) target = $region32
        $region31: #{tpu_custom_call.1} parent=23 // pred_region
          %176 = vsyncadd %s168, 0
          %s177 = smul.addr %s18, 8
          %s178 = scalar_lea.hbm %s1, %s177
          %s180 = sshll.u32 %s171, 4
          %s181 = int_to_ptr.vmem [resolvable:$true] %s180
          %s182 = sshll.u32 %s178, 4
          %s183 = int_to_ptr.hbm [resolvable:$true] %s182
          %185 = dma.vmem_to_hbm [thread:$0]  %s181, 128, %s183, %s168
        $region32: #{tpu_custom_call.1} parent=23 // pred_fallthru
          _
      $region24: #{tpu_custom_call.1} parent=5 // pred_fallthru
        _
      %p186 = scmp.le.s32.totalorder 2, %s13
      // Predicated region
      $region33: #{tpu_custom_call.1} parent=5 // pred_check
        %p187 = pneg %p186
      $region34: #{tpu_custom_call.1} parent=5 // pred_check_branch
        %189 = sbr.rel (%p187) target = $region36
      $region35: #{tpu_custom_call.1} parent=5 // pred_region
        %s190 = ssub.s32 %s13, 2
        // Predicated region
        $region37: #{tpu_custom_call.1} parent=35 // pred_check
          %p191 = pneg %p68
        $region38: #{tpu_custom_call.1} parent=35 // pred_check_branch
          %193 = sbr.rel (%p191) target = $region40
        $region39: #{tpu_custom_call.1} parent=35 // pred_region
          %s194 = sand.u32 %s53, 1
          %s195 = scalar_lea.sflag [#allocation4], %s194
          %s196 = sand.u32 %s53, 1
          %s197 = smul.addr %s196, 8
          %s198 = scalar_lea.vmem [#allocation5], %s197
          %200 = dma.done %s195, 128
        $region40: #{tpu_custom_call.1} parent=35 // pred_fallthru
          _
      $region36: #{tpu_custom_call.1} parent=5 // pred_fallthru
        _
    $region6: #{tpu_custom_call.1} parent=1 // loop_footer
      %s17 = sadd.s32 1, %s13
    $region7: #{tpu_custom_call.1} parent=1 // loop_footer_branch
      %12 = sbr.rel target = $region3
    $region8: #{tpu_custom_call.1} parent=1 // loop_exit
      _
    %201 = vsyncpa [#allocation3], 1
    %s202 = scalar_lea.sflag [#allocation3], 1
    %203 = vsyncpa %s202, 1
    %204 = vsyncpa [#allocation4], 1
    %s205 = scalar_lea.sflag [#allocation4], 1
    %206 = vsyncpa %s205, 1

</llo_original>
